<compile_context>
chip_gen: v7x
topology: tpu7x:2x2x1
jax: 0.10.0
libtpu: 0.0.40
codegen_flags: <defaults>
</compile_context>

<pallas_src>
import functools

import jax
import jax.numpy as jnp
import numpy as np
from jax.experimental import pallas as pl
from jax.experimental.pallas import tpu as pltpu


def _round_up(x, m):
    return ((x + m - 1) // m) * m


def _vqnet_kernel(blk_lo_ref, blk_cnt_ref, rows_ref, ii_ref, qzT_ref, vq_ref,
                  acc_ref, *, TI, TB):
    i_pid = pl.program_id(0)
    b_pid = pl.program_id(1)
    nb = pl.num_programs(1)

    @pl.when(b_pid == 0)
    def _():
        acc_ref[...] = jnp.zeros_like(acc_ref)

    # Only the B-blocks that actually contain this I-tile's (ii-sorted) observations
    # are processed; steps past this tile's own range are skipped.
    @pl.when(b_pid < blk_cnt_ref[i_pid])
    def _():
        # one_hot(ii - i*TI, TI): sentinel-padded / out-of-tile observations produce
        # all-zero columns, so no validity mask is needed.
        ii_rel = ii_ref[...] - i_pid * TI                            # (TB, 1) int32
        i_iota = jax.lax.broadcasted_iota(jnp.int32, (TB, TI), 1)    # (TB, TI)
        oh_ii = (i_iota == ii_rel).astype(jnp.float32)               # (TB, TI)
        # Segment-sum with I on the lane axis: (K,TB) @ (TB,TI), accumulated in VMEM.
        acc_ref[...] += jnp.dot(rows_ref[...], oh_ii,
                                preferred_element_type=jnp.float32)

    @pl.when(b_pid == nb - 1)
    def _():
        cll = acc_ref[...]                                           # (K, TI)
        m = jnp.max(cll, axis=0, keepdims=True)                      # (1, TI)
        e = jnp.exp(cll - m)
        z = jnp.sum(e, axis=0, keepdims=True)                        # (1, TI)
        inv_z = pl.reciprocal(z, approx=True)                        # EUP
        inv_z = inv_z * (2.0 - z * inv_z)                            # Newton -> ~f32
        qzT_ref[...] = e * inv_z                                     # softmax over K
        vq_ref[...] = m + jnp.log(z)                                 # Vq == logsumexp


def vqnet_forward(snr_logit, ii, jj, y, I, K):
    """Hard-label branch of VqNet.forward (y is a 1D integer label vector).

    Returns (qz [I, K], Vq [I]).  Runs eagerly: the segmented-B bookkeeping pulls a
    couple of scalars to the host (under jit fall back to nbmax = nb_total).
    """
    J = snr_logit.shape[0]
    B = int(ii.shape[0])
    y = y.reshape(-1)

    # ---- tile sizes ----------------------------------------------------------
    # I sits on the lane axis.  >1 I-tile whenever I > 256 so megacore (v7x) has work.
    if I <= 256:
        TI, Ip = I, I
    else:
        TI = 256 if I <= 2048 else 512
        Ip = _round_up(I, TI)
    ni = Ip // TI

    if B <= 2048:
        TB, Bp = B, B
    else:
        TB = 2048
        Bp = _round_up(B, TB)
    nb_total = Bp // TB

    # ---- per-observation log-likelihood rows, hoisted out of the kernel ------
    #   rows_T[k, b] = log(s_b * [k == y_b] + (1 - s_b) / K)
    ii32 = ii.astype(jnp.int32)
    s = jax.nn.sigmoid(snr_logit.astype(jnp.float32))[jj]            # (B,)
    noise = (1.0 - s) * (1.0 / K)
    log_noise = jnp.log(noise)
    log_sig = jnp.log(s + noise)
    k_iota = jnp.arange(K, dtype=jnp.int32)[:, None]                 # (K, 1)
    rows_T = jnp.where(k_iota == y.astype(jnp.int32)[None, :],
                       log_sig[None, :], log_noise[None, :])         # (K, B) f32

    # ---- sort by task + per-I-tile B-block ranges (scalar prefetch) ----------
    if ni > 1:
        order = jnp.argsort(ii32)
        ii_work = ii32[order]
        rows_T = rows_T[:, order]
        bounds = jnp.arange(ni + 1, dtype=jnp.int32) * TI
        pos = jnp.searchsorted(ii_work, bounds)                      # (ni+1,)
        starts, ends = pos[:-1], pos[1:]
        blk_lo = (starts // TB).astype(jnp.int32)
        blk_cnt = jnp.where(ends > starts,
                            (ends - 1) // TB - starts // TB + 1,
                            0).astype(jnp.int32)
        # Host pull (requires concrete inputs / eager execution).
        nbmax = max(int(jnp.max(blk_cnt)), 1)
    else:
        ii_work = ii32
        blk_lo = jnp.zeros((1,), jnp.int32)
        blk_cnt = jnp.full((1,), nb_total, jnp.int32)
        nbmax = nb_total

    # ---- pad B with an out-of-range sentinel (no validity mask in-kernel) ----
    if Bp > B:
        ii_work = jnp.pad(ii_work, (0, Bp - B), constant_values=Ip)
        rows_T = jnp.pad(rows_T, ((0, 0), (0, Bp - B)))
    ii_col = ii_work.reshape(Bp, 1)

    kernel = functools.partial(_vqnet_kernel, TI=TI, TB=TB)
    last_blk = nb_total - 1

    grid_spec = pltpu.PrefetchScalarGridSpec(
        num_scalar_prefetch=2,
        grid=(ni, nbmax),
        in_specs=[
            # rows^T: (K, TB) slab of this I-tile's b-th B-block (clamped).
            pl.BlockSpec((K, TB),
                         lambda i, b, lo, cnt: (0, jnp.minimum(lo[i] + b, last_blk))),
            # ii: (TB, 1) column of the same B-block.
            pl.BlockSpec((TB, 1),
                         lambda i, b, lo, cnt: (jnp.minimum(lo[i] + b, last_blk), 0)),
        ],
        out_specs=[
            pl.BlockSpec((K, TI), lambda i, b, lo, cnt: (0, i)),     # qz^T (I on lanes)
            pl.BlockSpec((1, TI), lambda i, b, lo, cnt: (0, i)),     # Vq   (I on lanes)
        ],
        scratch_shapes=[pltpu.VMEM((K, TI), jnp.float32)],           # cll accumulator
    )

    qz_T, vq_row = pl.pallas_call(
        kernel,
        grid_spec=grid_spec,
        out_shape=(jax.ShapeDtypeStruct((K, Ip), jnp.float32),
                   jax.ShapeDtypeStruct((1, Ip), jnp.float32)),
        compiler_params=pltpu.CompilerParams(
            dimension_semantics=("parallel", "arbitrary"),           # I-tiles megacore
            vmem_limit_bytes=32 * 1024 * 1024,
        ),
    )(blk_lo, blk_cnt, rows_T, ii_col)

    qz = qz_T[:, :I].T          # (I, K)
    vq = vq_row[0, :I]          # (I,)
    return qz, vq


def vqnet_reference(snr_logit, ii, jj, y, I, K):
    """Pure-JAX transcription of the PyTorch forward (hard-label branch)."""
    s = jax.nn.sigmoid(snr_logit).reshape(-1, 1, 1)
    sn = jax.nn.sigmoid(-snr_logit).reshape(-1, 1, 1)
    signal = jnp.eye(K, dtype=jnp.float32)[None]
    noise = (jnp.ones((K, K), jnp.float32) / K)[None]
    theta = (s * signal + sn * noise) / 2
    log_theta = jnp.log(theta / theta.sum(-1, keepdims=True))
    rows = jnp.swapaxes(log_theta, -2, -1)[jj, y]                        # (B, K)
    oh = jax.nn.one_hot(ii, I, dtype=jnp.float32)
    cll = jnp.dot(oh.T, rows, precision=jax.lax.Precision.HIGHEST)       # (I, K)
    qz = jax.nn.softmax(cll, axis=-1)
    vq = (qz * cll).sum(-1) - (qz * jnp.log(qz)).sum(-1)
    return qz, vq


if __name__ == "__main__":
    key = jax.random.PRNGKey(0)
    ks = jax.random.split(key, 8)

    # --- small demo (module-scale shapes): single I-tile / single B-block -----
    I, J, K, B = 8, 6, 4, 16  # tasks, workers, classes, observations
    snr_logit = jax.random.uniform(ks[0], (J,), jnp.float32, -0.07, 0.07)
    ii = jax.random.randint(ks[1], (B,), 0, I, dtype=jnp.int32)
    jj = jax.random.randint(ks[2], (B,), 0, J, dtype=jnp.int32)
    y = jax.random.randint(ks[3], (B,), 0, K, dtype=jnp.int32)

    qz, vq = vqnet_forward(snr_logit, ii, jj, y, I, K)
    jax.block_until_ready((qz, vq))
    qz_ref, vq_ref = vqnet_reference(snr_logit, ii, jj, y, I, K)
    np.testing.assert_allclose(np.asarray(qz), np.asarray(qz_ref), rtol=5e-4, atol=5e-4)
    np.testing.assert_allclose(np.asarray(vq), np.asarray(vq_ref), rtol=1e-4, atol=1e-4)

    # --- larger case: exercises I-tiling, B-tiling, sentinel padding, and the
    #     sorted / scalar-prefetch-segmented B loop -----------------------------
    I2, J2, K2, B2 = 600, 40, 5, 5000
    snr2 = jax.random.uniform(ks[4], (J2,), jnp.float32, -0.07, 0.07)
    ii2 = jax.random.randint(ks[5], (B2,), 0, I2, dtype=jnp.int32)
    jj2 = jax.random.randint(ks[6], (B2,), 0, J2, dtype=jnp.int32)
    y2 = jax.random.randint(ks[7], (B2,), 0, K2, dtype=jnp.int32)

    qz2, vq2 = vqnet_forward(snr2, ii2, jj2, y2, I2, K2)
    jax.block_until_ready((qz2, vq2))
    qz2_ref, vq2_ref = vqnet_reference(snr2, ii2, jj2, y2, I2, K2)
    np.testing.assert_allclose(np.asarray(qz2), np.asarray(qz2_ref), rtol=5e-4, atol=5e-4)
    np.testing.assert_allclose(np.asarray(vq2), np.asarray(vq2_ref), rtol=1e-4, atol=1e-4)

    print("KERNEL_OK")
</pallas_src>

<mosaic_0001>
module attributes {stable_mosaic.version = 11 : i64} {
  func.func @_vqnet_kernel(%arg0: i32, %arg1: i32, %arg2: memref<1xi32, #tpu.memory_space<smem>>, %arg3: memref<1xi32, #tpu.memory_space<smem>>, %arg4: memref<4x16xf32, #tpu.memory_space<vmem>>, %arg5: memref<16x1xi32, #tpu.memory_space<vmem>>, %arg6: memref<4x8xf32, #tpu.memory_space<vmem>>, %arg7: memref<1x8xf32, #tpu.memory_space<vmem>>, %arg8: memref<4x8xf32, #tpu.memory_space<vmem>>) attributes {dimension_semantics = [#tpu.dimension_semantics<parallel>, #tpu.dimension_semantics<arbitrary>], iteration_bounds = array<i64: 1, 1>, scalar_prefetch = 2 : i64, scratch_operands = 1 : i64, tpu.core_type = #tpu.core_type<tc>, window_params = [{transform_indices = @transform_0, window_bounds = array<i64: 4, 16>}, {transform_indices = @transform_1, window_bounds = array<i64: 16, 1>}, {transform_indices = @transform_2, window_bounds = array<i64: 4, 8>}, {transform_indices = @transform_3, window_bounds = array<i64: 1, 8>}]} {
    %c0_i32 = arith.constant 0 : i32
    %0 = arith.cmpi eq, %arg1, %c0_i32 : i32
    %1 = arith.extui %0 : i1 to i32
    %c0_i32_0 = arith.constant 0 : i32
    %2 = arith.cmpi ne, %1, %c0_i32_0 : i32
    scf.if %2 {
      %cst = arith.constant 0.000000e+00 : f32
      %11 = vector.broadcast %cst : f32 to vector<4x8xf32>
      %c0 = arith.constant 0 : index
      %c0_4 = arith.constant 0 : index
      %12 = vector.load %arg8[%c0, %c0_4] : memref<4x8xf32, #tpu.memory_space<vmem>>, vector<4x8xf32>
      tpu.vector_store %arg8[%c0, %c0_4], %11 {strides = array<i32>} : memref<4x8xf32, #tpu.memory_space<vmem>>, vector<4x8xf32>,
    } else {
    }
    %3 = arith.index_cast %arg0 : i32 to index
    %4 = memref.load %arg3[%3] : memref<1xi32, #tpu.memory_space<smem>>
    %5 = arith.cmpi slt, %arg1, %4 : i32
    %6 = arith.extui %5 : i1 to i32
    %c0_i32_1 = arith.constant 0 : i32
    %7 = arith.cmpi ne, %6, %c0_i32_1 : i32
    scf.if %7 {
      %c0 = arith.constant 0 : index
      %c0_4 = arith.constant 0 : index
      %11 = vector.load %arg5[%c0, %c0_4] : memref<16x1xi32, #tpu.memory_space<vmem>>, vector<16x1xi32>
      %c8_i32 = arith.constant 8 : i32
      %12 = arith.muli %arg0, %c8_i32 : i32
      %13 = vector.broadcast %12 : i32 to vector<16x1xi32>
      %14 = arith.subi %11, %13 : vector<16x1xi32>
      %15 = tpu.iota {dimensions = array<i32: 1>} : vector<16x8xi32>
      %16 = vector.broadcast %14 : vector<16x1xi32> to vector<16x8xi32>
      %17 = arith.cmpi eq, %15, %16 : vector<16x8xi32>
      %18 = arith.extui %17 : vector<16x8xi1> to vector<16x8xi32>
      %19 = arith.sitofp %18 : vector<16x8xi32> to vector<16x8xf32>
      %c0_5 = arith.constant 0 : index
      %c0_6 = arith.constant 0 : index
      %20 = vector.load %arg8[%c0_5, %c0_6] : memref<4x8xf32, #tpu.memory_space<vmem>>, vector<4x8xf32>
      %c0_7 = arith.constant 0 : index
      %c0_8 = arith.constant 0 : index
      %21 = vector.load %arg4[%c0_7, %c0_8] : memref<4x16xf32, #tpu.memory_space<vmem>>, vector<4x16xf32>
      %cst = arith.constant dense<0.000000e+00> : vector<4x8xf32>
      %22 = tpu.matmul %21, %19, %cst {dimension_numbers = #tpu.dot_dimension_numbers<[1], [0], [0], [1], [0, 0, 1, 1], [], []>} : vector<4x16xf32>, vector<16x8xf32>, vector<4x8xf32> -> vector<4x8xf32>
      %23 = arith.addf %20, %22 : vector<4x8xf32>
      %c0_9 = arith.constant 0 : index
      %c0_10 = arith.constant 0 : index
      %24 = vector.load %arg8[%c0_9, %c0_10] : memref<4x8xf32, #tpu.memory_space<vmem>>, vector<4x8xf32>
      tpu.vector_store %arg8[%c0_9, %c0_10], %23 {strides = array<i32>} : memref<4x8xf32, #tpu.memory_space<vmem>>, vector<4x8xf32>,
    } else {
    }
    %c0_i32_2 = arith.constant 0 : i32
    %8 = arith.cmpi eq, %arg1, %c0_i32_2 : i32
    %9 = arith.extui %8 : i1 to i32
    %c0_i32_3 = arith.constant 0 : i32
    %10 = arith.cmpi ne, %9, %c0_i32_3 : i32
    scf.if %10 {
      %c0 = arith.constant 0 : index
      %c0_4 = arith.constant 0 : index
      %11 = vector.load %arg8[%c0, %c0_4] : memref<4x8xf32, #tpu.memory_space<vmem>>, vector<4x8xf32>
      %cst = arith.constant dense<0xFF800000> : vector<8xf32>
      %12 = vector.multi_reduction <maximumf>, %11, %cst [0] : vector<4x8xf32> to vector<8xf32>
      %13 = vector.shape_cast %12 : vector<8xf32> to vector<1x8xf32>
      %14 = vector.broadcast %13 : vector<1x8xf32> to vector<4x8xf32>
      %15 = arith.subf %11, %14 : vector<4x8xf32>
      %16 = math.exp %15 : vector<4x8xf32>
      %cst_5 = arith.constant dense<0.000000e+00> : vector<8xf32>
      %17 = vector.multi_reduction <add>, %16, %cst_5 [0] : vector<4x8xf32> to vector<8xf32>
      %18 = vector.shape_cast %17 : vector<8xf32> to vector<1x8xf32>
      %19 = tpu.reciprocal %18 {approx = true} : vector<1x8xf32> -> vector<1x8xf32>
      %20 = arith.mulf %18, %19 : vector<1x8xf32>
      %cst_6 = arith.constant 2.000000e+00 : f32
      %21 = vector.broadcast %cst_6 : f32 to vector<1x8xf32>
      %22 = arith.subf %21, %20 : vector<1x8xf32>
      %23 = arith.mulf %19, %22 : vector<1x8xf32>
      %24 = vector.broadcast %23 : vector<1x8xf32> to vector<4x8xf32>
      %25 = arith.mulf %16, %24 : vector<4x8xf32>
      %c0_7 = arith.constant 0 : index
      %c0_8 = arith.constant 0 : index
      %26 = vector.load %arg6[%c0_7, %c0_8] : memref<4x8xf32, #tpu.memory_space<vmem>>, vector<4x8xf32>
      tpu.vector_store %arg6[%c0_7, %c0_8], %25 {strides = array<i32>} : memref<4x8xf32, #tpu.memory_space<vmem>>, vector<4x8xf32>,
      %27 = math.log %18 : vector<1x8xf32>
      %28 = arith.addf %13, %27 : vector<1x8xf32>
      %c0_9 = arith.constant 0 : index
      %c0_10 = arith.constant 0 : index
      %29 = vector.load %arg7[%c0_9, %c0_10] : memref<1x8xf32, #tpu.memory_space<vmem>>, vector<1x8xf32>
      tpu.vector_store %arg7[%c0_9, %c0_10], %28 {strides = array<i32>} : memref<1x8xf32, #tpu.memory_space<vmem>>, vector<1x8xf32>,
    } else {
    }
    return
  }
  func.func @transform_0(%arg0: i32, %arg1: i32, %arg2: memref<1xi32, #tpu.memory_space<smem>>, %arg3: memref<1xi32, #tpu.memory_space<smem>>) -> (i32, i32) {
    %0 = arith.index_cast %arg0 : i32 to index
    %1 = memref.load %arg2[%0] : memref<1xi32, #tpu.memory_space<smem>>
    %2 = arith.addi %1, %arg1 : i32
    %c0_i32 = arith.constant 0 : i32
    %3 = arith.minsi %2, %c0_i32 : i32
    %c0_i32_0 = arith.constant 0 : i32
    %c0_i32_1 = arith.constant 0 : i32
    return %c0_i32_0, %3 : i32, i32
  }
  func.func @transform_1(%arg0: i32, %arg1: i32, %arg2: memref<1xi32, #tpu.memory_space<smem>>, %arg3: memref<1xi32, #tpu.memory_space<smem>>) -> (i32, i32) {
    %0 = arith.index_cast %arg0 : i32 to index
    %1 = memref.load %arg2[%0] : memref<1xi32, #tpu.memory_space<smem>>
    %2 = arith.addi %1, %arg1 : i32
    %c0_i32 = arith.constant 0 : i32
    %3 = arith.minsi %2, %c0_i32 : i32
    %c0_i32_0 = arith.constant 0 : i32
    %c0_i32_1 = arith.constant 0 : i32
    return %3, %c0_i32_0 : i32, i32
  }
  func.func @transform_2(%arg0: i32, %arg1: i32, %arg2: memref<1xi32, #tpu.memory_space<smem>>, %arg3: memref<1xi32, #tpu.memory_space<smem>>) -> (i32, i32) {
    %c0_i32 = arith.constant 0 : i32
    %c0_i32_0 = arith.constant 0 : i32
    return %c0_i32, %arg0 : i32, i32
  }
  func.func @transform_3(%arg0: i32, %arg1: i32, %arg2: memref<1xi32, #tpu.memory_space<smem>>, %arg3: memref<1xi32, #tpu.memory_space<smem>>) -> (i32, i32) {
    %c0_i32 = arith.constant 0 : i32
    %c0_i32_0 = arith.constant 0 : i32
    return %c0_i32, %arg0 : i32, i32
  }
}

</mosaic_0001>

<llo_original>
// kernel: tpu_custom_call.1
$region0: #{tpu_custom_call.1}
  #allocation0 [shape = 'u32[]', space=smem, size = 0x4, offset = 0x4, fixed_abs, tag = 'smem constant byte address 0x4 - core index']
  #allocation1 [shape = 'u32[144,128]{1,0:T(1,128)}', space=vmem, size = 0x12000, scoped, tag = 'internal scratch']
  #allocation2 [shape = 'f32[4,8]{1,0:T(4,128)}', space=vmem, size = 0x800, scoped, tag = 'scratch operand']
  #allocation3 [shape = 's32[1]{0}', space=sflag, size = 0x4, scoped, tag = 'scoped memory for tpu_custom_call.1']
  #allocation4 [shape = 's32[1]{0:T(128)S(6)}', space=smem, size = 0x200, scoped, tag = 'prefetched SMEM operand 0']
  #allocation5 [shape = 's32[1]{0:T(128)S(6)}', space=smem, size = 0x200, scoped, tag = 'prefetched SMEM operand 1']
  %s0 = inlined_call_operand.<no memory space> [shape: s32[1], index: 0, kind: input, shape index: {}]
  %s1 = inlined_call_operand.<no memory space> [shape: s32[1], index: 1, kind: input, shape index: {}]
  %s2 = inlined_call_operand.vmem [shape: f32[4,16], index: 2, kind: input, shape index: {}]
  %s3 = inlined_call_operand.vmem [shape: s32[16,1], index: 3, kind: input, shape index: {}]
  %s4 = inlined_call_operand.hbm [shape: f32[4,8], index: 4, kind: output, shape index: {0}]
  %s5 = inlined_call_operand.hbm [shape: f32[1,8], index: 5, kind: output, shape index: {1}]
  %6 = xla_tuple %s4, %s5
  %s7 = sld [smem:[#allocation0]]
  $region38: #{tpu_custom_call.1} parent=0
    _
  %s9 = ssub.s32 1, %s7
  %s10 = scalar_select 0, %s9, %s7
  %11 = sst [smem:[#allocation4]] %s0
  %12 = sst [smem:[#allocation5]] %s1
  $region1: #{tpu_custom_call.1} parent=0
    #allocation6 [shape = 'u8[2048]{0}', space=vmem, size = 0x800, scoped, tag = 'output window, operand 0, single buffered']
    #allocation7 [shape = 's32[1]{0}', space=sflag, size = 0x4, scoped, tag = 'scoped memory for tpu_custom_call.1']
    #allocation8 [shape = 'u8[512]{0}', space=vmem, size = 0x400, scoped, tag = 'output window, operand 1, single buffered']
    #allocation9 [shape = 's32[1]{0}', space=sflag, size = 0x4, scoped, tag = 'scoped memory for tpu_custom_call.1']
    %13 = vsyncpa [#allocation7], 0
    %14 = vsyncpa [#allocation9], 0
    // Predicated region
    $region2: #{tpu_custom_call.1} parent=1 // pred_check
      _
    $region3: #{tpu_custom_call.1} parent=1 // pred_check_branch
      %16 = sbr.rel (0) target = $region5
    $region4: #{tpu_custom_call.1} parent=1 // pred_region
      %s17 = sld [smem:[#allocation4]]
      %s18 = sadd.s32 %s17, 0
      %p19 = scmp.lt.s32.totalorder %s18, 0
      %s20 = scalar_select %p19, %s18, 0
      %p21 = scmp.lt.s32.totalorder %s20, 0
      %s22 = scalar_select %p21, %s20, 0
      %s23 = smul.addr %s22, 4
      %s24 = scalar_lea.vmem %s2, %s23
      %s25 = sld [smem:[#allocation4]]
      %s26 = sadd.s32 %s25, 0
      %p27 = scmp.lt.s32.totalorder %s26, 0
      %s28 = scalar_select %p27, %s26, 0
    $region5: #{tpu_custom_call.1} parent=1 // pred_fallthru
      _
    // Predicated region
    $region6: #{tpu_custom_call.1} parent=1 // pred_check
      _
    $region7: #{tpu_custom_call.1} parent=1 // pred_check_branch
      %30 = sbr.rel (0) target = $region9
    $region8: #{tpu_custom_call.1} parent=1 // pred_region
      %s31 = sld [smem:[#allocation4]]
      %s32 = sadd.s32 %s31, 0
      %p33 = scmp.lt.s32.totalorder %s32, 0
      %s34 = scalar_select %p33, %s32, 0
      %s35 = smul.u32 2, %s34
      %p36 = scmp.lt.s32.totalorder %s35, 1
      %s37 = scalar_select %p36, %s35, 1
      %s38 = smul.addr %s37, 8
      %s39 = scalar_lea.vmem %s3, %s38
      %s40 = sld [smem:[#allocation4]]
      %s41 = sadd.s32 %s40, 0
      %p42 = scmp.lt.s32.totalorder %s41, 0
      %s43 = scalar_select %p42, %s41, 0
      %s44 = smul.u32 2, %s43
    $region9: #{tpu_custom_call.1} parent=1 // pred_fallthru
      _
    %s45 = sld [smem:[#allocation4]]
    %s46 = sadd.s32 %s45, 0
    %p47 = scmp.lt.s32.totalorder %s46, 0
    %s48 = scalar_select %p47, %s46, 0
    %p49 = scmp.lt.s32.totalorder %s48, 0
    %s50 = scalar_select %p49, %s48, 0
    %s51 = smul.addr %s50, 4
    %s52 = scalar_lea.vmem %s2, %s51
    %s53 = sld [smem:[#allocation4]]
    %s54 = sadd.s32 %s53, 0
    %p55 = scmp.lt.s32.totalorder %s54, 0
    %s56 = scalar_select %p55, %s54, 0
    %s57 = smul.u32 2, %s56
    %p58 = scmp.lt.s32.totalorder %s57, 1
    %s59 = scalar_select %p58, %s57, 1
    %s60 = smul.addr %s59, 8
    %s61 = scalar_lea.vmem %s3, %s60
    %s62 = sld [smem:[#allocation4]]
    %s63 = sadd.s32 %s62, 0
    %p64 = scmp.lt.s32.totalorder %s63, 0
    %s65 = scalar_select %p64, %s63, 0
    %p66 = scmp.lt.s32.totalorder %s65, 0
    %s67 = scalar_select %p66, %s65, 0
    %s68 = smul.addr %s67, 4
    %s69 = scalar_lea.vmem %s2, %s68
    %s70 = sld [smem:[#allocation4]]
    %s71 = sadd.s32 %s70, 0
    %p72 = scmp.lt.s32.totalorder %s71, 0
    %s73 = scalar_select %p72, %s71, 0
    %s74 = sld [smem:[#allocation4]]
    %s75 = sadd.s32 %s74, 0
    %p76 = scmp.lt.s32.totalorder %s75, 0
    %s77 = scalar_select %p76, %s75, 0
    %s78 = smul.u32 2, %s77
    %p79 = scmp.lt.s32.totalorder %s78, 1
    %s80 = scalar_select %p79, %s78, 1
    %s81 = smul.addr %s80, 8
    %s82 = scalar_lea.vmem %s3, %s81
    %s83 = sld [smem:[#allocation4]]
    %s84 = sadd.s32 %s83, 0
    %p85 = scmp.lt.s32.totalorder %s84, 0
    %s86 = scalar_select %p85, %s84, 0
    %s87 = smul.u32 2, %s86
    %p88 = scmp.eq.s32.totalorder 0, 0
    // Predicated region
    $region10: #{tpu_custom_call.1} parent=1 // pred_check
      %p89 = pneg %p88
    $region11: #{tpu_custom_call.1} parent=1 // pred_check_branch
      %91 = sbr.rel (%p89) target = $region13
    $region12: #{tpu_custom_call.1} parent=1 // pred_region
      %vm92 = vcmask 60416
      %93 = vst.msk [vmem:[#allocation2] sm:$0xf] %vm92, 0.0
    $region13: #{tpu_custom_call.1} parent=1 // pred_fallthru
      _
    %s94 = sld [smem:[#allocation5]]
    %p95 = scmp.lt.s32.totalorder 0, %s94
    // Predicated region
    $region14: #{tpu_custom_call.1} parent=1 // pred_check
      %p96 = pneg %p95
    $region15: #{tpu_custom_call.1} parent=1 // pred_check_branch
      %98 = sbr.rel (%p96) target = $region17
    $region16: #{tpu_custom_call.1} parent=1 // pred_region
      %v99 = vld [vmem:[%s82] sm:$0xff]
      %v100 = vld [vmem:[%s82 + $0x8] sm:$0xff]
      %s101 = smul.u32 0, 8
      %v102 = vstv %s101
      %v103 = vsub.s32 %v99, %v102
      %v104 = vsub.s32 %v100, %v102
      %v105 = vlaneseq
      %v106 = vand.u32 %v105, 127
      %107 = vset.pattern.permute.xlu0 0
      %108 = vperm.xlu0 %107, %v103
      %v109 = vpop.permute.xlu0 %108
      %110 = vset.pattern.permute.xlu0 0
      %111 = vperm.xlu0 %110, %v104
      %v112 = vpop.permute.xlu0 %111
      %vm113 = vcmp.eq.s32.totalorder %v106, %v109
      %vm114 = vcmp.eq.s32.totalorder %v106, %v112
      %v115 = vsel %vm113, 1, 0
      %v116 = vsel %vm114, 1, 0
      %v117 = vcvt.s32.f32 %v115
      %v118 = vcvt.s32.f32 %v116
      %v119 = vld [vmem:[#allocation2] sm:$0xf]
      %v120 = vld [vmem:[%s69] sm:$0xf]
      %vm121 = vcmask 130048
      %v123 = vsel %vm121, %v120, 0
      %125 = vmatprep.subr.mxu0 0.0
      %126 = vmatpush1.msra.mxu0 %v117
      %127 = vmatprep.subr.mxu0 0.0
      %128 = vmatpush1.msra.mxu0 %v118
      %129 = vmatprep.subr.mxu0 0.0
      %130 = vmatpush1.msra.mxu0 0.0
      %131 = vmatprep.subr.mxu0 0.0
      %132 = vmatpush1.msra.mxu0 0.0
      %133 = vmatprep.subr.mxu0 0.0
      %134 = vmatpush1.msra.mxu0 0.0
      %135 = vmatprep.subr.mxu0 0.0
      %136 = vmatpush1.msra.mxu0 0.0
      %137 = vmatprep.subr.mxu0 0.0
      %138 = vmatpush1.msra.mxu0 0.0
      %139 = vmatprep.subr.mxu0 0.0
      %140 = vmatpush1.msra.mxu0 0.0
      %141 = vmatprep.subr.mxu0 0.0
      %142 = vmatpush1.msra.mxu0 0.0
      %143 = vmatprep.subr.mxu0 0.0
      %144 = vmatpush1.msra.mxu0 0.0
      %145 = vmatprep.subr.mxu0 0.0
      %146 = vmatpush1.msra.mxu0 0.0
      %147 = vmatprep.subr.mxu0 0.0
      %148 = vmatpush1.msra.mxu0 0.0
      %149 = vmatprep.subr.mxu0 0.0
      %150 = vmatpush1.msra.mxu0 0.0
      %151 = vmatprep.subr.mxu0 0.0
      %152 = vmatpush1.msra.mxu0 0.0
      %153 = vmatprep.subr.mxu0 0.0
      %154 = vmatpush1.msra.mxu0 0.0
      %155 = vmatprep.subr.mxu0 0.0
      %156 = vmatpush1.msra.mxu0 0.0
      %157 = vmatprep.subr.mxu0 0.0
      %158 = vmatpush1.msra.mxu0 0.0
      %159 = vmatprep.subr.mxu0 0.0
      %160 = vmatpush1.msra.mxu0 0.0
      %161 = vmatprep.subr.mxu0 0.0
      %162 = vmatpush1.msra.mxu0 0.0
      %163 = vmatprep.subr.mxu0 0.0
      %164 = vmatpush1.msra.mxu0 0.0
      %165 = vmatprep.subr.mxu0 0.0
      %166 = vmatpush1.msra.mxu0 0.0
      %167 = vmatprep.subr.mxu0 0.0
      %168 = vmatpush1.msra.mxu0 0.0
      %169 = vmatprep.subr.mxu0 0.0
      %170 = vmatpush1.msra.mxu0 0.0
      %171 = vmatprep.subr.mxu0 0.0
      %172 = vmatpush1.msra.mxu0 0.0
      %173 = vmatprep.subr.mxu0 0.0
      %174 = vmatpush1.msra.mxu0 0.0
      %175 = vmatprep.subr.mxu0 0.0
      %176 = vmatpush1.msra.mxu0 0.0
      %177 = vmatprep.subr.mxu0 0.0
      %178 = vmatpush1.msra.mxu0 0.0
      %179 = vmatprep.subr.mxu0 0.0
      %180 = vmatpush1.msra.mxu0 0.0
      %181 = vmatprep.subr.mxu0 0.0
      %182 = vmatpush1.msra.mxu0 0.0
      %183 = vmatprep.subr.mxu0 0.0
      %184 = vmatpush1.msra.mxu0 0.0
      %185 = vmatprep.subr.mxu0 0.0
      %186 = vmatpush1.msra.mxu0 0.0
      %187 = vmatprep.subr.mxu0 0.0
      %188 = vmatpush1.msra.mxu0 0.0
      %189 = vmatprep.mubr.f32.mxu0 0.0
      %190 = vmatmul.mubr.f32.gmra.mrb[0].mxu0 %v123
      %v191 = vpop.f32.mrb[0].mxu0
      %v192 = vadd.f32 0.0, %v191
      %v193 = vpop.f32.mrb[0].mxu0
      %194 = vdwg.mxu0
      %v195 = vadd.f32 %v119, %v192
      %vm196 = vcmask 60416
      %197 = vst.msk [vmem:[#allocation2] sm:$0xf] %vm196, %v195
    $region17: #{tpu_custom_call.1} parent=1 // pred_fallthru
      _
    // Predicated region
    $region18: #{tpu_custom_call.1} parent=1 // pred_check
      %p198 = pneg %p88
    $region19: #{tpu_custom_call.1} parent=1 // pred_check_branch
      %200 = sbr.rel (%p198) target = $region21
    $region20: #{tpu_custom_call.1} parent=1 // pred_region
      %v201 = vld [vmem:[#allocation2] sm:$0xf]
      %vm202 = vcmask 60416
      %v203 = vsel %vm202, %v201, -inf
      %v204 = vrot.slane %v203, 4
      %v205 = vmax.f32 %v203, %v204
      %v206 = vrot.slane %v205, 2
      %v207 = vmax.f32 %v205, %v206
      %v208 = vrot.slane %v207, 1
      %v209 = vmax.f32 %v207, %v208
      %v210 = vsub.f32 %v201, %v209
      %v211 = vmul.f32 %v210, 1.442695
      %v212 = vpow.pop %v211
      %v213 = vsel %vm202, %v212, 0.0
      %v214 = vrot.slane %v213, 4
      %v215 = vadd.f32 %v213, %v214
      %v216 = vrot.slane %v215, 2
      %v217 = vadd.f32 %v215, %v216
      %v218 = vrot.slane %v217, 1
      %v219 = vadd.f32 %v217, %v218
      %v220 = vrcp.pop %v219
      %v221 = vmul.f32 %v219, %v220
      %v222 = vsub.f32 2.0, %v221
      %v223 = vmul.f32 %v220, %v222
      %v224 = vmul.f32 %v212, %v223
      %225 = vst.msk [vmem:[#allocation6] sm:$0xf] %vm202, %v224
      %v226 = vlog2.pop %v219
      %v227 = vmul.f32 %v226, 0.6931472
      %v228 = vadd.f32 %v209, %v227
      %vm229 = vcmask 57344
      %230 = vst.msk [vmem:[#allocation8] sm:$0x1] %vm229, %v228
    $region21: #{tpu_custom_call.1} parent=1 // pred_fallthru
      _
    // Predicated region
    $region22: #{tpu_custom_call.1} parent=1 // pred_check
      _
    $region23: #{tpu_custom_call.1} parent=1 // pred_check_branch
      %232 = sbr.rel (0) target = $region25
    $region24: #{tpu_custom_call.1} parent=1 // pred_region
      %s234 = ssub.s32 64, 64
      %235 = vsyncadd [#allocation7], %s234
      %s237 = sshll.u32 [#allocation6], 4
      %s238 = int_to_ptr.vmem [resolvable:$true] %s237
      %240 = dma.vmem_to_hbm [thread:$0]  %s238, 64, %s4, [#allocation7]
    $region25: #{tpu_custom_call.1} parent=1 // pred_fallthru
      _
    // Predicated region
    $region26: #{tpu_custom_call.1} parent=1 // pred_check
      _
    $region27: #{tpu_custom_call.1} parent=1 // pred_check_branch
      %242 = sbr.rel (0) target = $region29
    $region28: #{tpu_custom_call.1} parent=1 // pred_region
      %s244 = ssub.s32 16, 16
      %245 = vsyncadd [#allocation9], %s244
      %s247 = sshll.u32 [#allocation8], 4
      %s248 = int_to_ptr.vmem [resolvable:$true] %s247
      %250 = dma.vmem_to_hbm [thread:$0]  %s248, 16, %s5, [#allocation9]
    $region29: #{tpu_custom_call.1} parent=1 // pred_fallthru
      _
    // Predicated region
    $region30: #{tpu_custom_call.1} parent=1 // pred_check
      _
    $region31: #{tpu_custom_call.1} parent=1 // pred_check_branch
      %252 = sbr.rel (0) target = $region33
    $region32: #{tpu_custom_call.1} parent=1 // pred_region
      %253 = dma.done [#allocation7], 64
    $region33: #{tpu_custom_call.1} parent=1 // pred_fallthru
      _
    // Predicated region
    $region34: #{tpu_custom_call.1} parent=1 // pred_check
      _
    $region35: #{tpu_custom_call.1} parent=1 // pred_check_branch
      %255 = sbr.rel (0) target = $region37
    $region36: #{tpu_custom_call.1} parent=1 // pred_region
      %256 = dma.done [#allocation9], 16
    $region37: #{tpu_custom_call.1} parent=1 // pred_fallthru
      _
    %257 = vsyncpa [#allocation7], 1
    %258 = vsyncpa [#allocation9], 1

</llo_original>
